<compile_context>
chip_gen: v7x
topology: tpu7x:2x2x1
jax: 0.10.0
libtpu: 0.0.40
codegen_flags: <defaults>
</compile_context>

<pallas_src>
import numpy as np
import jax
import jax.numpy as jnp
from jax.experimental import pallas as pl
from jax.experimental.pallas import tpu as pltpu


# ----------------------------- Pallas kernel -------------------------------
def make_fused_decoder_kernel(x_meta, layer_meta):
    """Kernel computing all decoder layers in one invocation.

    slab_ref : (rows, width) f32 slab holding, at static row offsets:
                 x        (C0, N0)       channel-major noise input
                 W_l      (C_out, C_in)  Conv1d(k=1) weight (squeezed)
                 U_T_l    (N_in, N_out)  effective MeanUps matrix U.T @ A_tilde.T
    o_ref    : (C_last, N_last) lane-dense output (== model(x)[0]).
    """
    xr, xc, xn = x_meta

    def kernel(slab_ref, o_ref):
        h = slab_ref[xr:xr + xc, :xn]                               # (C0, N0)
        for (wr, co, ci), (ur, ni, no) in layer_meta:
            w = slab_ref[wr:wr + co, :ci]                           # (C_out, C_in)
            u_t = slab_ref[ur:ur + ni, :no]                         # (N_in, N_out)
            # Conv1d(kernel=1, bias=False): pure channel mixing.
            y = jnp.dot(w, h, preferred_element_type=jnp.float32)   # (C_out, N_in)
            # MeanUps / Upsampling: input.matmul(U_T).
            z = jnp.dot(y, u_t, preferred_element_type=jnp.float32) # (C_out, N_out)
            # act_fn / last_act_fn == nn.Tanh()
            h = jnp.tanh(z)
        o_ref[...] = h

    return kernel


def pack_decoder_params(x, weights, u_t_effs, lane_pad=128, sublane_pad=8):
    """Pack input + all layer parameters into one f32 slab (build-time, once).

    Each block starts at a row offset that is a multiple of 8 and at column 0;
    the slab width is a multiple of 128.  Returns (slab, x_meta, layer_meta)
    where the metas are static Python ints used for zero-cost ref slicing
    inside the kernel.
    """
    x_cn = np.asarray(x[0], dtype=np.float32)                         # (C0, N0)
    ws = [np.asarray(w[:, :, 0], dtype=np.float32) for w in weights]  # (C_out, C_in)
    us = [np.asarray(u, dtype=np.float32) for u in u_t_effs]          # (N_in, N_out)

    blocks = [x_cn] + [m for pair in zip(ws, us) for m in pair]
    width = max(b.shape[1] for b in blocks)
    width = int(-(-width // lane_pad) * lane_pad)

    offsets, row = [], 0
    for b in blocks:
        offsets.append(row)
        row += int(-(-b.shape[0] // sublane_pad) * sublane_pad)
    slab = np.zeros((max(row, sublane_pad), width), dtype=np.float32)
    for off, b in zip(offsets, blocks):
        slab[off:off + b.shape[0], :b.shape[1]] = b

    x_meta = (offsets[0], x_cn.shape[0], x_cn.shape[1])
    layer_meta = []
    for l, (w, u) in enumerate(zip(ws, us)):
        layer_meta.append(((offsets[1 + 2 * l], w.shape[0], w.shape[1]),
                           (offsets[2 + 2 * l], u.shape[0], u.shape[1])))
    return jnp.asarray(slab), x_meta, layer_meta


def build_forward(x_meta, layer_meta):
    """Returns a jitted forward(slab) -> model(x).T.squeeze() equivalent."""
    c_last = layer_meta[-1][0][1]
    n_last = layer_meta[-1][1][2]

    call = pl.pallas_call(
        make_fused_decoder_kernel(x_meta, layer_meta),
        in_specs=[pl.BlockSpec(memory_space=pltpu.MemorySpace.VMEM)],
        out_specs=pl.BlockSpec(memory_space=pltpu.MemorySpace.VMEM),
        out_shape=jax.ShapeDtypeStruct((c_last, n_last), jnp.float32),
        compiler_params=pltpu.CompilerParams(vmem_limit_bytes=32 * 1024 * 1024),
    )

    @jax.jit
    def forward(slab):
        out_cn = call(slab)                 # (C_last, N_last), lane-dense store
        # PyTorch: model(x).T.squeeze()
        if c_last == 1:
            return out_cn[0]                # (N_last,)
        return out_cn.T                     # (N_last, C_last)

    return forward


# --------------------------- parameter building ----------------------------
def mean_ups_effective_U_T(U, A, gamma):
    """Exactly MeanUps.__init__: U_T_eff = U.T @ A_tilde.T, shape (N_in, N_out)."""
    assert np.allclose(A, A.T)
    D = np.diag(A.sum(0))
    if np.linalg.matrix_rank(D) != A.shape[0]:
        A_norm = np.linalg.pinv(D) @ A
    else:
        A_norm = np.linalg.inv(D) @ A
    A_tilde = gamma * np.eye(A.shape[0]) + (1.0 - gamma) * A_norm
    return (U.T @ A_tilde.T).astype(np.float32)


def build_graph_deep_decoder(features, nodes, gamma=0.5, w_std=0.01, input_std=0.01,
                             seed=0):
    """Deterministically builds conv weights, effective upsampling matrices and the
    decoder's noise input, matching GraphDeepDecoder.__init__ shapes."""
    assert len(features) == len(nodes)
    key = jax.random.PRNGKey(seed)
    w_stds = w_std / np.sqrt(np.asarray(features, dtype=np.float64))

    weights = []   # Conv1d weights, shape (C_out, C_in, 1)
    u_t_effs = []  # effective upsampling matrices U_T_eff, shape (nodes[l], nodes[l+1])
    for l in range(len(features) - 1):
        key, kw = jax.random.split(key)
        w = (jax.random.normal(kw, (features[l + 1], features[l], 1), jnp.float32)
             * jnp.float32(w_stds[l]))
        weights.append(w)

        child, parent = nodes[l + 1], nodes[l]
        # Deterministic synthetic upsampling matrix: child i copies parent i % parent
        U = np.zeros((child, parent), dtype=np.float32)
        U[np.arange(child), np.arange(child) % parent] = 1.0
        # Deterministic symmetric adjacency on the child graph: ring graph
        A = np.zeros((child, child), dtype=np.float32)
        idx = np.arange(child)
        A[idx, (idx + 1) % child] = 1.0
        A[(idx + 1) % child, idx] = 1.0
        u_t_effs.append(jnp.asarray(mean_ups_effective_U_T(U, A, gamma)))

    # Decoder input noise: shape (1, fts[0], nodes[0]), std = input_std / sqrt(nodes[0])
    key, kx = jax.random.split(key)
    x = (jax.random.normal(kx, (1, features[0], nodes[0]), jnp.float32)
         * jnp.float32(input_std / np.sqrt(nodes[0])))
    return x, weights, u_t_effs


# ------------------------------- reference ----------------------------------
def graph_deep_decoder_reference(x, weights, u_t_effs):
    h = x[0]                                              # (C0, N0) channel-major
    for w, u_t in zip(weights, u_t_effs):
        h = jnp.tanh((w[:, :, 0] @ h) @ u_t)
    return h[0] if h.shape[0] == 1 else h.T               # model(x).T.squeeze()


if __name__ == "__main__":
    features = [8, 8, 8, 4]
    nodes = [8, 16, 32, 32]

    x, weights, u_t_effs = build_graph_deep_decoder(features, nodes, seed=0)

    # Build-time packing (one slab -> one HBM->VMEM DMA per forward call).
    slab, x_meta, layer_meta = pack_decoder_params(x, weights, u_t_effs)
    forward = build_forward(x_meta, layer_meta)

    out = jax.block_until_ready(forward(slab))
    ref = jax.block_until_ready(graph_deep_decoder_reference(x, weights, u_t_effs))

    assert out.shape == (nodes[-1], features[-1])
    assert out.shape == ref.shape
    np.testing.assert_allclose(np.asarray(out), np.asarray(ref), rtol=1e-5, atol=1e-6)

    print("KERNEL_OK")
</pallas_src>

<mosaic_0001>
module attributes {stable_mosaic.version = 11 : i64} {
  func.func @kernel(%arg0: memref<88x128xf32, #tpu.memory_space<vmem>>, %arg1: memref<4x32xf32, #tpu.memory_space<vmem>>) attributes {dimension_semantics = [], scalar_prefetch = 0 : i64, scratch_operands = 0 : i64, tpu.core_type = #tpu.core_type<tc>} {
    %c0 = arith.constant 0 : index
    %c0_0 = arith.constant 0 : index
    %0 = vector.load %arg0[%c0, %c0_0] : memref<88x128xf32, #tpu.memory_space<vmem>>, vector<8x8xf32>
    %c8 = arith.constant 8 : index
    %c0_1 = arith.constant 0 : index
    %1 = vector.load %arg0[%c8, %c0_1] : memref<88x128xf32, #tpu.memory_space<vmem>>, vector<8x8xf32>
    %c16 = arith.constant 16 : index
    %c0_2 = arith.constant 0 : index
    %2 = vector.load %arg0[%c16, %c0_2] : memref<88x128xf32, #tpu.memory_space<vmem>>, vector<8x16xf32>
    %cst = arith.constant dense<0.000000e+00> : vector<8x8xf32>
    %3 = tpu.matmul %1, %0, %cst {dimension_numbers = #tpu.dot_dimension_numbers<[1], [0], [0], [1], [0, 0, 1, 1], [], []>} : vector<8x8xf32>, vector<8x8xf32>, vector<8x8xf32> -> vector<8x8xf32>
    %cst_3 = arith.constant dense<0.000000e+00> : vector<8x16xf32>
    %4 = tpu.matmul %3, %2, %cst_3 {dimension_numbers = #tpu.dot_dimension_numbers<[1], [0], [0], [1], [0, 0, 1, 1], [], []>} : vector<8x8xf32>, vector<8x16xf32>, vector<8x16xf32> -> vector<8x16xf32>
    %5 = math.tanh %4 : vector<8x16xf32>
    %c24 = arith.constant 24 : index
    %c0_4 = arith.constant 0 : index
    %6 = vector.load %arg0[%c24, %c0_4] : memref<88x128xf32, #tpu.memory_space<vmem>>, vector<8x8xf32>
    %c32 = arith.constant 32 : index
    %c0_5 = arith.constant 0 : index
    %7 = vector.load %arg0[%c32, %c0_5] : memref<88x128xf32, #tpu.memory_space<vmem>>, vector<16x32xf32>
    %cst_6 = arith.constant dense<0.000000e+00> : vector<8x16xf32>
    %8 = tpu.matmul %6, %5, %cst_6 {dimension_numbers = #tpu.dot_dimension_numbers<[1], [0], [0], [1], [0, 0, 1, 1], [], []>} : vector<8x8xf32>, vector<8x16xf32>, vector<8x16xf32> -> vector<8x16xf32>
    %cst_7 = arith.constant dense<0.000000e+00> : vector<8x32xf32>
    %9 = tpu.matmul %8, %7, %cst_7 {dimension_numbers = #tpu.dot_dimension_numbers<[1], [0], [0], [1], [0, 0, 1, 1], [], []>} : vector<8x16xf32>, vector<16x32xf32>, vector<8x32xf32> -> vector<8x32xf32>
    %10 = math.tanh %9 : vector<8x32xf32>
    %c48 = arith.constant 48 : index
    %c0_8 = arith.constant 0 : index
    %11 = vector.load %arg0[%c48, %c0_8] : memref<88x128xf32, #tpu.memory_space<vmem>>, vector<4x8xf32>
    %c56 = arith.constant 56 : index
    %c0_9 = arith.constant 0 : index
    %12 = vector.load %arg0[%c56, %c0_9] : memref<88x128xf32, #tpu.memory_space<vmem>>, vector<32x32xf32>
    %cst_10 = arith.constant dense<0.000000e+00> : vector<4x32xf32>
    %13 = tpu.matmul %11, %10, %cst_10 {dimension_numbers = #tpu.dot_dimension_numbers<[1], [0], [0], [1], [0, 0, 1, 1], [], []>} : vector<4x8xf32>, vector<8x32xf32>, vector<4x32xf32> -> vector<4x32xf32>
    %cst_11 = arith.constant dense<0.000000e+00> : vector<4x32xf32>
    %14 = tpu.matmul %13, %12, %cst_11 {dimension_numbers = #tpu.dot_dimension_numbers<[1], [0], [0], [1], [0, 0, 1, 1], [], []>} : vector<4x32xf32>, vector<32x32xf32>, vector<4x32xf32> -> vector<4x32xf32>
    %15 = math.tanh %14 : vector<4x32xf32>
    %c0_12 = arith.constant 0 : index
    %c0_13 = arith.constant 0 : index
    %16 = vector.load %arg1[%c0_12, %c0_13] : memref<4x32xf32, #tpu.memory_space<vmem>>, vector<4x32xf32>
    tpu.vector_store %arg1[%c0_12, %c0_13], %15 {strides = array<i32>} : memref<4x32xf32, #tpu.memory_space<vmem>>, vector<4x32xf32>,
    return
  }
}

</mosaic_0001>

<llo_original>
// kernel: forward.1
$region0: #{forward.1}
  #allocation0 [shape = 'u32[]', space=smem, size = 0x4, offset = 0x4, fixed_abs, tag = 'smem constant byte address 0x4 - core index']
  #allocation1 [shape = 'u32[144,128]{1,0:T(1,128)}', space=vmem, size = 0x12000, scoped, tag = 'internal scratch']
  %s0 = inlined_call_operand.hbm [shape: f32[88,128], index: 0, kind: input, shape index: {}]
  %s1 = inlined_call_operand.hbm [shape: f32[4,32], index: 1, kind: output, shape index: {}]
  %s2 = sld [smem:[#allocation0]]
  $region18: #{forward.1} parent=0
    _
  %s4 = ssub.s32 1, %s2
  %s5 = scalar_select 0, %s4, %s2
  $region1: #{forward.1} parent=0
    #allocation2 [shape = 'u8[45056]{0}', space=vmem, size = 0xb000, scoped, tag = 'input window, operand 0, single buffered']
    #allocation3 [shape = 's32[1]{0}', space=sflag, size = 0x4, scoped, tag = 'scoped memory for forward.1']
    #allocation4 [shape = 's32[1]{0}', space=sflag, size = 0x4, scoped, tag = 'scoped memory for forward.1']
    #allocation5 [shape = 'u8[2048]{0}', space=vmem, size = 0x800, scoped, tag = 'output window, operand 0, single buffered']
    %6 = vsyncpa [#allocation3], 0
    %7 = vsyncpa [#allocation4], 0
    // Predicated region
    $region2: #{forward.1} parent=1 // pred_check
      _
    $region3: #{forward.1} parent=1 // pred_check_branch
      %9 = sbr.rel (0) target = $region5
    $region4: #{forward.1} parent=1 // pred_region
      %s11 = ssub.s32 1408, 1408
      %12 = vsyncadd [#allocation3], %s11
      %s13 = sshll.u32 [#allocation2], 4
      %s14 = int_to_ptr.vmem [resolvable:$true] %s13
      %19 = dma.hbm_to_vmem [thread:$0]  %s0, 1408, %s14, [#allocation3], 128, 128, 8
    $region5: #{forward.1} parent=1 // pred_fallthru
      _
    // Predicated region
    $region6: #{forward.1} parent=1 // pred_check
      _
    $region7: #{forward.1} parent=1 // pred_check_branch
      %21 = sbr.rel (0) target = $region9
    $region8: #{forward.1} parent=1 // pred_region
      %22 = dma.done [#allocation3], 1408
    $region9: #{forward.1} parent=1 // pred_fallthru
      _
    %v23 = vld [vmem:[#allocation2] sm:$0xff]
    %v24 = vld [vmem:[#allocation2 + $0x8] sm:$0xff]
    %v25 = vld [vmem:[#allocation2 + $0x10] sm:$0xff]
    %vm26 = vcmask 64512
    %v28 = vsel %vm26, %v24, 0
    %30 = vmatprep.subr.mxu0 0.0
    %31 = vmatpush1.msra.mxu0 %v23
    %32 = vmatprep.subr.mxu0 0.0
    %33 = vmatpush1.msra.mxu0 0.0
    %34 = vmatprep.subr.mxu0 0.0
    %35 = vmatpush1.msra.mxu0 0.0
    %36 = vmatprep.subr.mxu0 0.0
    %37 = vmatpush1.msra.mxu0 0.0
    %38 = vmatprep.subr.mxu0 0.0
    %39 = vmatpush1.msra.mxu0 0.0
    %40 = vmatprep.subr.mxu0 0.0
    %41 = vmatpush1.msra.mxu0 0.0
    %42 = vmatprep.subr.mxu0 0.0
    %43 = vmatpush1.msra.mxu0 0.0
    %44 = vmatprep.subr.mxu0 0.0
    %45 = vmatpush1.msra.mxu0 0.0
    %46 = vmatprep.subr.mxu0 0.0
    %47 = vmatpush1.msra.mxu0 0.0
    %48 = vmatprep.subr.mxu0 0.0
    %49 = vmatpush1.msra.mxu0 0.0
    %50 = vmatprep.subr.mxu0 0.0
    %51 = vmatpush1.msra.mxu0 0.0
    %52 = vmatprep.subr.mxu0 0.0
    %53 = vmatpush1.msra.mxu0 0.0
    %54 = vmatprep.subr.mxu0 0.0
    %55 = vmatpush1.msra.mxu0 0.0
    %56 = vmatprep.subr.mxu0 0.0
    %57 = vmatpush1.msra.mxu0 0.0
    %58 = vmatprep.subr.mxu0 0.0
    %59 = vmatpush1.msra.mxu0 0.0
    %60 = vmatprep.subr.mxu0 0.0
    %61 = vmatpush1.msra.mxu0 0.0
    %62 = vmatprep.subr.mxu0 0.0
    %63 = vmatpush1.msra.mxu0 0.0
    %64 = vmatprep.subr.mxu0 0.0
    %65 = vmatpush1.msra.mxu0 0.0
    %66 = vmatprep.subr.mxu0 0.0
    %67 = vmatpush1.msra.mxu0 0.0
    %68 = vmatprep.subr.mxu0 0.0
    %69 = vmatpush1.msra.mxu0 0.0
    %70 = vmatprep.subr.mxu0 0.0
    %71 = vmatpush1.msra.mxu0 0.0
    %72 = vmatprep.subr.mxu0 0.0
    %73 = vmatpush1.msra.mxu0 0.0
    %74 = vmatprep.subr.mxu0 0.0
    %75 = vmatpush1.msra.mxu0 0.0
    %76 = vmatprep.subr.mxu0 0.0
    %77 = vmatpush1.msra.mxu0 0.0
    %78 = vmatprep.subr.mxu0 0.0
    %79 = vmatpush1.msra.mxu0 0.0
    %80 = vmatprep.subr.mxu0 0.0
    %81 = vmatpush1.msra.mxu0 0.0
    %82 = vmatprep.subr.mxu0 0.0
    %83 = vmatpush1.msra.mxu0 0.0
    %84 = vmatprep.subr.mxu0 0.0
    %85 = vmatpush1.msra.mxu0 0.0
    %86 = vmatprep.subr.mxu0 0.0
    %87 = vmatpush1.msra.mxu0 0.0
    %88 = vmatprep.subr.mxu0 0.0
    %89 = vmatpush1.msra.mxu0 0.0
    %90 = vmatprep.subr.mxu0 0.0
    %91 = vmatpush1.msra.mxu0 0.0
    %92 = vmatprep.subr.mxu0 0.0
    %93 = vmatpush1.msra.mxu0 0.0
    %94 = vmatprep.mubr.f32.mxu0 0.0
    %95 = vmatmul.mubr.f32.gmra.mrb[0].mxu0 %v28
    %v96 = vpop.f32.mrb[0].mxu0
    %v97 = vadd.f32 0.0, %v96
    %v98 = vpop.f32.mrb[0].mxu0
    %99 = vdwg.mxu0
    %v101 = vsel %vm26, %v97, 0
    %103 = vmatprep.subr.mxu0 0.0
    %104 = vmatpush1.msra.mxu0 %v25
    %105 = vmatprep.subr.mxu0 0.0
    %106 = vmatpush1.msra.mxu0 0.0
    %107 = vmatprep.subr.mxu0 0.0
    %108 = vmatpush1.msra.mxu0 0.0
    %109 = vmatprep.subr.mxu0 0.0
    %110 = vmatpush1.msra.mxu0 0.0
    %111 = vmatprep.subr.mxu0 0.0
    %112 = vmatpush1.msra.mxu0 0.0
    %113 = vmatprep.subr.mxu0 0.0
    %114 = vmatpush1.msra.mxu0 0.0
    %115 = vmatprep.subr.mxu0 0.0
    %116 = vmatpush1.msra.mxu0 0.0
    %117 = vmatprep.subr.mxu0 0.0
    %118 = vmatpush1.msra.mxu0 0.0
    %119 = vmatprep.subr.mxu0 0.0
    %120 = vmatpush1.msra.mxu0 0.0
    %121 = vmatprep.subr.mxu0 0.0
    %122 = vmatpush1.msra.mxu0 0.0
    %123 = vmatprep.subr.mxu0 0.0
    %124 = vmatpush1.msra.mxu0 0.0
    %125 = vmatprep.subr.mxu0 0.0
    %126 = vmatpush1.msra.mxu0 0.0
    %127 = vmatprep.subr.mxu0 0.0
    %128 = vmatpush1.msra.mxu0 0.0
    %129 = vmatprep.subr.mxu0 0.0
    %130 = vmatpush1.msra.mxu0 0.0
    %131 = vmatprep.subr.mxu0 0.0
    %132 = vmatpush1.msra.mxu0 0.0
    %133 = vmatprep.subr.mxu0 0.0
    %134 = vmatpush1.msra.mxu0 0.0
    %135 = vmatprep.subr.mxu0 0.0
    %136 = vmatpush1.msra.mxu0 0.0
    %137 = vmatprep.subr.mxu0 0.0
    %138 = vmatpush1.msra.mxu0 0.0
    %139 = vmatprep.subr.mxu0 0.0
    %140 = vmatpush1.msra.mxu0 0.0
    %141 = vmatprep.subr.mxu0 0.0
    %142 = vmatpush1.msra.mxu0 0.0
    %143 = vmatprep.subr.mxu0 0.0
    %144 = vmatpush1.msra.mxu0 0.0
    %145 = vmatprep.subr.mxu0 0.0
    %146 = vmatpush1.msra.mxu0 0.0
    %147 = vmatprep.subr.mxu0 0.0
    %148 = vmatpush1.msra.mxu0 0.0
    %149 = vmatprep.subr.mxu0 0.0
    %150 = vmatpush1.msra.mxu0 0.0
    %151 = vmatprep.subr.mxu0 0.0
    %152 = vmatpush1.msra.mxu0 0.0
    %153 = vmatprep.subr.mxu0 0.0
    %154 = vmatpush1.msra.mxu0 0.0
    %155 = vmatprep.subr.mxu0 0.0
    %156 = vmatpush1.msra.mxu0 0.0
    %157 = vmatprep.subr.mxu0 0.0
    %158 = vmatpush1.msra.mxu0 0.0
    %159 = vmatprep.subr.mxu0 0.0
    %160 = vmatpush1.msra.mxu0 0.0
    %161 = vmatprep.subr.mxu0 0.0
    %162 = vmatpush1.msra.mxu0 0.0
    %163 = vmatprep.subr.mxu0 0.0
    %164 = vmatpush1.msra.mxu0 0.0
    %165 = vmatprep.subr.mxu0 0.0
    %166 = vmatpush1.msra.mxu0 0.0
    %167 = vmatprep.mubr.f32.mxu0 0.0
    %168 = vmatmul.mubr.f32.gmra.mrb[0].mxu0 %v101
    %v169 = vpop.f32.mrb[0].mxu0
    %v170 = vadd.f32 0.0, %v169
    %v171 = vpop.f32.mrb[0].mxu0
    %172 = vdwg.mxu0
    %v173 = vtanh.pop %v170
    %v174 = vld [vmem:[#allocation2 + $0x18] sm:$0xff]
    %v175 = vld [vmem:[#allocation2 + $0x20] sm:$0xff]
    %v176 = vld [vmem:[#allocation2 + $0x28] sm:$0xff]
    %v178 = vsel %vm26, %v174, 0
    %180 = vmatprep.subr.mxu0 0.0
    %181 = vmatpush1.msra.mxu0 %v173
    %182 = vmatprep.subr.mxu0 0.0
    %183 = vmatpush1.msra.mxu0 0.0
    %184 = vmatprep.subr.mxu0 0.0
    %185 = vmatpush1.msra.mxu0 0.0
    %186 = vmatprep.subr.mxu0 0.0
    %187 = vmatpush1.msra.mxu0 0.0
    %188 = vmatprep.subr.mxu0 0.0
    %189 = vmatpush1.msra.mxu0 0.0
    %190 = vmatprep.subr.mxu0 0.0
    %191 = vmatpush1.msra.mxu0 0.0
    %192 = vmatprep.subr.mxu0 0.0
    %193 = vmatpush1.msra.mxu0 0.0
    %194 = vmatprep.subr.mxu0 0.0
    %195 = vmatpush1.msra.mxu0 0.0
    %196 = vmatprep.subr.mxu0 0.0
    %197 = vmatpush1.msra.mxu0 0.0
    %198 = vmatprep.subr.mxu0 0.0
    %199 = vmatpush1.msra.mxu0 0.0
    %200 = vmatprep.subr.mxu0 0.0
    %201 = vmatpush1.msra.mxu0 0.0
    %202 = vmatprep.subr.mxu0 0.0
    %203 = vmatpush1.msra.mxu0 0.0
    %204 = vmatprep.subr.mxu0 0.0
    %205 = vmatpush1.msra.mxu0 0.0
    %206 = vmatprep.subr.mxu0 0.0
    %207 = vmatpush1.msra.mxu0 0.0
    %208 = vmatprep.subr.mxu0 0.0
    %209 = vmatpush1.msra.mxu0 0.0
    %210 = vmatprep.subr.mxu0 0.0
    %211 = vmatpush1.msra.mxu0 0.0
    %212 = vmatprep.subr.mxu0 0.0
    %213 = vmatpush1.msra.mxu0 0.0
    %214 = vmatprep.subr.mxu0 0.0
    %215 = vmatpush1.msra.mxu0 0.0
    %216 = vmatprep.subr.mxu0 0.0
    %217 = vmatpush1.msra.mxu0 0.0
    %218 = vmatprep.subr.mxu0 0.0
    %219 = vmatpush1.msra.mxu0 0.0
    %220 = vmatprep.subr.mxu0 0.0
    %221 = vmatpush1.msra.mxu0 0.0
    %222 = vmatprep.subr.mxu0 0.0
    %223 = vmatpush1.msra.mxu0 0.0
    %224 = vmatprep.subr.mxu0 0.0
    %225 = vmatpush1.msra.mxu0 0.0
    %226 = vmatprep.subr.mxu0 0.0
    %227 = vmatpush1.msra.mxu0 0.0
    %228 = vmatprep.subr.mxu0 0.0
    %229 = vmatpush1.msra.mxu0 0.0
    %230 = vmatprep.subr.mxu0 0.0
    %231 = vmatpush1.msra.mxu0 0.0
    %232 = vmatprep.subr.mxu0 0.0
    %233 = vmatpush1.msra.mxu0 0.0
    %234 = vmatprep.subr.mxu0 0.0
    %235 = vmatpush1.msra.mxu0 0.0
    %236 = vmatprep.subr.mxu0 0.0
    %237 = vmatpush1.msra.mxu0 0.0
    %238 = vmatprep.subr.mxu0 0.0
    %239 = vmatpush1.msra.mxu0 0.0
    %240 = vmatprep.subr.mxu0 0.0
    %241 = vmatpush1.msra.mxu0 0.0
    %242 = vmatprep.subr.mxu0 0.0
    %243 = vmatpush1.msra.mxu0 0.0
    %244 = vmatprep.mubr.f32.mxu0 0.0
    %245 = vmatmul.mubr.f32.gmra.mrb[0].mxu0 %v178
    %v246 = vpop.f32.mrb[0].mxu0
    %v247 = vadd.f32 0.0, %v246
    %v248 = vpop.f32.mrb[0].mxu0
    %249 = vdwg.mxu0
    %vm250 = vcmask 130048
    %v252 = vsel %vm250, %v247, 0
    %254 = vmatprep.subr.mxu0 0.0
    %255 = vmatpush1.msra.mxu0 %v175
    %256 = vmatprep.subr.mxu0 0.0
    %257 = vmatpush1.msra.mxu0 %v176
    %258 = vmatprep.subr.mxu0 0.0
    %259 = vmatpush1.msra.mxu0 0.0
    %260 = vmatprep.subr.mxu0 0.0
    %261 = vmatpush1.msra.mxu0 0.0
    %262 = vmatprep.subr.mxu0 0.0
    %263 = vmatpush1.msra.mxu0 0.0
    %264 = vmatprep.subr.mxu0 0.0
    %265 = vmatpush1.msra.mxu0 0.0
    %266 = vmatprep.subr.mxu0 0.0
    %267 = vmatpush1.msra.mxu0 0.0
    %268 = vmatprep.subr.mxu0 0.0
    %269 = vmatpush1.msra.mxu0 0.0
    %270 = vmatprep.subr.mxu0 0.0
    %271 = vmatpush1.msra.mxu0 0.0
    %272 = vmatprep.subr.mxu0 0.0
    %273 = vmatpush1.msra.mxu0 0.0
    %274 = vmatprep.subr.mxu0 0.0
    %275 = vmatpush1.msra.mxu0 0.0
    %276 = vmatprep.subr.mxu0 0.0
    %277 = vmatpush1.msra.mxu0 0.0
    %278 = vmatprep.subr.mxu0 0.0
    %279 = vmatpush1.msra.mxu0 0.0
    %280 = vmatprep.subr.mxu0 0.0
    %281 = vmatpush1.msra.mxu0 0.0
    %282 = vmatprep.subr.mxu0 0.0
    %283 = vmatpush1.msra.mxu0 0.0
    %284 = vmatprep.subr.mxu0 0.0
    %285 = vmatpush1.msra.mxu0 0.0
    %286 = vmatprep.subr.mxu0 0.0
    %287 = vmatpush1.msra.mxu0 0.0
    %288 = vmatprep.subr.mxu0 0.0
    %289 = vmatpush1.msra.mxu0 0.0
    %290 = vmatprep.subr.mxu0 0.0
    %291 = vmatpush1.msra.mxu0 0.0
    %292 = vmatprep.subr.mxu0 0.0
    %293 = vmatpush1.msra.mxu0 0.0
    %294 = vmatprep.subr.mxu0 0.0
    %295 = vmatpush1.msra.mxu0 0.0
    %296 = vmatprep.subr.mxu0 0.0
    %297 = vmatpush1.msra.mxu0 0.0
    %298 = vmatprep.subr.mxu0 0.0
    %299 = vmatpush1.msra.mxu0 0.0
    %300 = vmatprep.subr.mxu0 0.0
    %301 = vmatpush1.msra.mxu0 0.0
    %302 = vmatprep.subr.mxu0 0.0
    %303 = vmatpush1.msra.mxu0 0.0
    %304 = vmatprep.subr.mxu0 0.0
    %305 = vmatpush1.msra.mxu0 0.0
    %306 = vmatprep.subr.mxu0 0.0
    %307 = vmatpush1.msra.mxu0 0.0
    %308 = vmatprep.subr.mxu0 0.0
    %309 = vmatpush1.msra.mxu0 0.0
    %310 = vmatprep.subr.mxu0 0.0
    %311 = vmatpush1.msra.mxu0 0.0
    %312 = vmatprep.subr.mxu0 0.0
    %313 = vmatpush1.msra.mxu0 0.0
    %314 = vmatprep.subr.mxu0 0.0
    %315 = vmatpush1.msra.mxu0 0.0
    %316 = vmatprep.subr.mxu0 0.0
    %317 = vmatpush1.msra.mxu0 0.0
    %318 = vmatprep.mubr.f32.mxu0 0.0
    %319 = vmatmul.mubr.f32.gmra.mrb[0].mxu0 %v252
    %v320 = vpop.f32.mrb[0].mxu0
    %v321 = vadd.f32 0.0, %v320
    %v322 = vpop.f32.mrb[0].mxu0
    %323 = vdwg.mxu0
    %v324 = vtanh.pop %v321
    %v325 = vld [vmem:[#allocation2 + $0x30] sm:$0xf]
    %v326 = vld [vmem:[#allocation2 + $0x38] sm:$0xff]
    %v327 = vld [vmem:[#allocation2 + $0x40] sm:$0xff]
    %v328 = vld [vmem:[#allocation2 + $0x48] sm:$0xff]
    %v329 = vld [vmem:[#allocation2 + $0x50] sm:$0xff]
    %v331 = vsel %vm26, %v325, 0
    %333 = vmatprep.subr.mxu0 0.0
    %334 = vmatpush1.msra.mxu0 %v324
    %335 = vmatprep.subr.mxu0 0.0
    %336 = vmatpush1.msra.mxu0 0.0
    %337 = vmatprep.subr.mxu0 0.0
    %338 = vmatpush1.msra.mxu0 0.0
    %339 = vmatprep.subr.mxu0 0.0
    %340 = vmatpush1.msra.mxu0 0.0
    %341 = vmatprep.subr.mxu0 0.0
    %342 = vmatpush1.msra.mxu0 0.0
    %343 = vmatprep.subr.mxu0 0.0
    %344 = vmatpush1.msra.mxu0 0.0
    %345 = vmatprep.subr.mxu0 0.0
    %346 = vmatpush1.msra.mxu0 0.0
    %347 = vmatprep.subr.mxu0 0.0
    %348 = vmatpush1.msra.mxu0 0.0
    %349 = vmatprep.subr.mxu0 0.0
    %350 = vmatpush1.msra.mxu0 0.0
    %351 = vmatprep.subr.mxu0 0.0
    %352 = vmatpush1.msra.mxu0 0.0
    %353 = vmatprep.subr.mxu0 0.0
    %354 = vmatpush1.msra.mxu0 0.0
    %355 = vmatprep.subr.mxu0 0.0
    %356 = vmatpush1.msra.mxu0 0.0
    %357 = vmatprep.subr.mxu0 0.0
    %358 = vmatpush1.msra.mxu0 0.0
    %359 = vmatprep.subr.mxu0 0.0
    %360 = vmatpush1.msra.mxu0 0.0
    %361 = vmatprep.subr.mxu0 0.0
    %362 = vmatpush1.msra.mxu0 0.0
    %363 = vmatprep.subr.mxu0 0.0
    %364 = vmatpush1.msra.mxu0 0.0
    %365 = vmatprep.subr.mxu0 0.0
    %366 = vmatpush1.msra.mxu0 0.0
    %367 = vmatprep.subr.mxu0 0.0
    %368 = vmatpush1.msra.mxu0 0.0
    %369 = vmatprep.subr.mxu0 0.0
    %370 = vmatpush1.msra.mxu0 0.0
    %371 = vmatprep.subr.mxu0 0.0
    %372 = vmatpush1.msra.mxu0 0.0
    %373 = vmatprep.subr.mxu0 0.0
    %374 = vmatpush1.msra.mxu0 0.0
    %375 = vmatprep.subr.mxu0 0.0
    %376 = vmatpush1.msra.mxu0 0.0
    %377 = vmatprep.subr.mxu0 0.0
    %378 = vmatpush1.msra.mxu0 0.0
    %379 = vmatprep.subr.mxu0 0.0
    %380 = vmatpush1.msra.mxu0 0.0
    %381 = vmatprep.subr.mxu0 0.0
    %382 = vmatpush1.msra.mxu0 0.0
    %383 = vmatprep.subr.mxu0 0.0
    %384 = vmatpush1.msra.mxu0 0.0
    %385 = vmatprep.subr.mxu0 0.0
    %386 = vmatpush1.msra.mxu0 0.0
    %387 = vmatprep.subr.mxu0 0.0
    %388 = vmatpush1.msra.mxu0 0.0
    %389 = vmatprep.subr.mxu0 0.0
    %390 = vmatpush1.msra.mxu0 0.0
    %391 = vmatprep.subr.mxu0 0.0
    %392 = vmatpush1.msra.mxu0 0.0
    %393 = vmatprep.subr.mxu0 0.0
    %394 = vmatpush1.msra.mxu0 0.0
    %395 = vmatprep.subr.mxu0 0.0
    %396 = vmatpush1.msra.mxu0 0.0
    %397 = vmatprep.mubr.f32.mxu0 0.0
    %398 = vmatmul.mubr.f32.gmra.mrb[0].mxu0 %v331
    %v399 = vpop.f32.mrb[0].mxu0
    %v400 = vadd.f32 0.0, %v399
    %v401 = vpop.f32.mrb[0].mxu0
    %402 = vdwg.mxu0
    %vm403 = vcmask 261120
    %v405 = vsel %vm403, %v400, 0
    %407 = vmatprep.subr.mxu0 0.0
    %408 = vmatpush1.msra.mxu0 %v326
    %409 = vmatprep.subr.mxu0 0.0
    %410 = vmatpush1.msra.mxu0 %v327
    %411 = vmatprep.subr.mxu0 0.0
    %412 = vmatpush1.msra.mxu0 %v328
    %413 = vmatprep.subr.mxu0 0.0
    %414 = vmatpush1.msra.mxu0 %v329
    %415 = vmatprep.subr.mxu0 0.0
    %416 = vmatpush1.msra.mxu0 0.0
    %417 = vmatprep.subr.mxu0 0.0
    %418 = vmatpush1.msra.mxu0 0.0
    %419 = vmatprep.subr.mxu0 0.0
    %420 = vmatpush1.msra.mxu0 0.0
    %421 = vmatprep.subr.mxu0 0.0
    %422 = vmatpush1.msra.mxu0 0.0
    %423 = vmatprep.subr.mxu0 0.0
    %424 = vmatpush1.msra.mxu0 0.0
    %425 = vmatprep.subr.mxu0 0.0
    %426 = vmatpush1.msra.mxu0 0.0
    %427 = vmatprep.subr.mxu0 0.0
    %428 = vmatpush1.msra.mxu0 0.0
    %429 = vmatprep.subr.mxu0 0.0
    %430 = vmatpush1.msra.mxu0 0.0
    %431 = vmatprep.subr.mxu0 0.0
    %432 = vmatpush1.msra.mxu0 0.0
    %433 = vmatprep.subr.mxu0 0.0
    %434 = vmatpush1.msra.mxu0 0.0
    %435 = vmatprep.subr.mxu0 0.0
    %436 = vmatpush1.msra.mxu0 0.0
    %437 = vmatprep.subr.mxu0 0.0
    %438 = vmatpush1.msra.mxu0 0.0
    %439 = vmatprep.subr.mxu0 0.0
    %440 = vmatpush1.msra.mxu0 0.0
    %441 = vmatprep.subr.mxu0 0.0
    %442 = vmatpush1.msra.mxu0 0.0
    %443 = vmatprep.subr.mxu0 0.0
    %444 = vmatpush1.msra.mxu0 0.0
    %445 = vmatprep.subr.mxu0 0.0
    %446 = vmatpush1.msra.mxu0 0.0
    %447 = vmatprep.subr.mxu0 0.0
    %448 = vmatpush1.msra.mxu0 0.0
    %449 = vmatprep.subr.mxu0 0.0
    %450 = vmatpush1.msra.mxu0 0.0
    %451 = vmatprep.subr.mxu0 0.0
    %452 = vmatpush1.msra.mxu0 0.0
    %453 = vmatprep.subr.mxu0 0.0
    %454 = vmatpush1.msra.mxu0 0.0
    %455 = vmatprep.subr.mxu0 0.0
    %456 = vmatpush1.msra.mxu0 0.0
    %457 = vmatprep.subr.mxu0 0.0
    %458 = vmatpush1.msra.mxu0 0.0
    %459 = vmatprep.subr.mxu0 0.0
    %460 = vmatpush1.msra.mxu0 0.0
    %461 = vmatprep.subr.mxu0 0.0
    %462 = vmatpush1.msra.mxu0 0.0
    %463 = vmatprep.subr.mxu0 0.0
    %464 = vmatpush1.msra.mxu0 0.0
    %465 = vmatprep.subr.mxu0 0.0
    %466 = vmatpush1.msra.mxu0 0.0
    %467 = vmatprep.subr.mxu0 0.0
    %468 = vmatpush1.msra.mxu0 0.0
    %469 = vmatprep.subr.mxu0 0.0
    %470 = vmatpush1.msra.mxu0 0.0
    %471 = vmatprep.mubr.f32.mxu0 0.0
    %472 = vmatmul.mubr.f32.gmra.mrb[0].mxu0 %v405
    %v473 = vpop.f32.mrb[0].mxu0
    %v474 = vadd.f32 0.0, %v473
    %v475 = vpop.f32.mrb[0].mxu0
    %476 = vdwg.mxu0
    %v477 = vtanh.pop %v474
    %vm478 = vcmask 257024
    %479 = vst.msk [vmem:[#allocation5] sm:$0xf] %vm478, %v477
    // Predicated region
    $region10: #{forward.1} parent=1 // pred_check
      _
    $region11: #{forward.1} parent=1 // pred_check_branch
      %481 = sbr.rel (0) target = $region13
    $region12: #{forward.1} parent=1 // pred_region
      %s483 = ssub.s32 64, 64
      %484 = vsyncadd [#allocation4], %s483
      %s486 = sshll.u32 [#allocation5], 4
      %s487 = int_to_ptr.vmem [resolvable:$true] %s486
      %489 = dma.vmem_to_hbm [thread:$0]  %s487, 64, %s1, [#allocation4]
    $region13: #{forward.1} parent=1 // pred_fallthru
      _
    // Predicated region
    $region14: #{forward.1} parent=1 // pred_check
      _
    $region15: #{forward.1} parent=1 // pred_check_branch
      %491 = sbr.rel (0) target = $region17
    $region16: #{forward.1} parent=1 // pred_region
      %492 = dma.done [#allocation4], 64
    $region17: #{forward.1} parent=1 // pred_fallthru
      _
    %493 = vsyncpa [#allocation3], 1
    %494 = vsyncpa [#allocation4], 1

</llo_original>
